<compile_context>
chip_gen: v6e
topology: v6e:2x2x1
jax: 0.10.0
libtpu: 0.0.40
codegen_flags: <defaults>
</compile_context>

<pallas_src>
import math
from typing import NamedTuple, Union, Tuple, Any

import jax
import jax.numpy as jnp
from jax.experimental import pallas as pl
from jax.experimental.pallas import tpu as pltpu


# ----------------------------------------------------------------------------
# Helpers
# ----------------------------------------------------------------------------
_LANE = 128                       # lane quantum for stat-row tiling
_LANE_TILE_MAX = 512              # widest lane tile per grid step
_BLOCK_BUDGET_BYTES = 3 << 20     # per-input per-buffer VMEM budget (~3 MiB)


def _round_up(x, m):
    return ((x + m - 1) // m) * m


def _choose_tiles(total_rows, max_hw, itemsize):
    """Pick (lane_tile, hw_tile, hw_pad, r_pad) under a VMEM budget."""
    lane_tile = min(_LANE_TILE_MAX, _round_up(total_rows, _LANE))
    r_pad = _round_up(total_rows, lane_tile)
    # Largest spatial tile (multiple of 8) that keeps one input block <= budget.
    max_hw_tile = max(8, (_BLOCK_BUDGET_BYTES // (lane_tile * itemsize)) // 8 * 8)
    hw_rounded = _round_up(max_hw, 8)
    if hw_rounded <= max_hw_tile:
        hw_tile = hw_rounded
        hw_pad = hw_rounded
    else:
        hw_tile = max_hw_tile
        hw_pad = _round_up(max_hw, hw_tile)
    return lane_tile, hw_tile, hw_pad, r_pad


# ----------------------------------------------------------------------------
# Fused Pallas kernel: per-lane weighted covariance pool
#   out[0, r] = scale[0, r] * sum_s a_slab[s, r] * b_slab[s, r]
# ----------------------------------------------------------------------------
def fused_weighted_covariance_pool(a_slab, b_slab, scale_row, hw_tile, lane_tile):
    """a_slab, b_slab: (hw_pad, r_pad); scale_row: (1, r_pad) f32 -> (1, r_pad) f32."""
    hw_pad, r_pad = a_slab.shape
    assert r_pad % lane_tile == 0 and hw_pad % hw_tile == 0
    grid = (r_pad // lane_tile, hw_pad // hw_tile)

    def kernel(a_ref, b_ref, s_ref, o_ref, acc_ref):
        k = pl.program_id(1)

        @pl.when(k == 0)
        def _():
            acc_ref[...] = jnp.zeros_like(acc_ref)

        # Elementwise product on the VPU, sublane reduce on the XLU; f32 accumulate.
        prod = a_ref[...].astype(jnp.float32) * b_ref[...].astype(jnp.float32)
        acc_ref[...] += jnp.sum(prod, axis=0, keepdims=True)

        @pl.when(k == pl.num_programs(1) - 1)
        def _():
            # Lane-dense (1, lane_tile) store, scaled by per-row weight / true HW.
            o_ref[...] = acc_ref[...] * s_ref[...]

    return pl.pallas_call(
        kernel,
        out_shape=jax.ShapeDtypeStruct((1, r_pad), jnp.float32),
        grid_spec=pltpu.PrefetchScalarGridSpec(
            num_scalar_prefetch=0,
            grid=grid,
            in_specs=[
                pl.BlockSpec((hw_tile, lane_tile), lambda i, k: (k, i)),   # A slab
                pl.BlockSpec((hw_tile, lane_tile), lambda i, k: (k, i)),   # B slab
                pl.BlockSpec((1, lane_tile), lambda i, k: (0, i)),         # scales
            ],
            out_specs=pl.BlockSpec((1, lane_tile), lambda i, k: (0, i)),
            scratch_shapes=[pltpu.VMEM((1, lane_tile), jnp.float32)],
        ),
        compiler_params=pltpu.CompilerParams(
            dimension_semantics=("parallel", "arbitrary")),
    )(a_slab, b_slab, scale_row)


def _build_slab(chunks, hw_list, hw_pad, r_pad, dtype):
    """Transpose each (rows, hw) chunk to (hw, rows), pad sublanes to hw_pad,
    concatenate rows along lanes, pad lanes to r_pad."""
    cols = []
    for flat, hw in zip(chunks, hw_list):
        t = flat.astype(dtype).T                      # (hw, nrows): rows -> lanes
        if hw < hw_pad:
            t = jnp.pad(t, ((0, hw_pad - hw), (0, 0)))
        cols.append(t)
    slab = jnp.concatenate(cols, axis=1)
    total = slab.shape[1]
    if total < r_pad:
        slab = jnp.pad(slab, ((0, 0), (0, r_pad - total)))
    return slab


# ----------------------------------------------------------------------------
# Glue: stat labels, pair iteration, synthetic steerable pyramid
# ----------------------------------------------------------------------------
def range_unique_pairs(limit):
    for i in range(limit - 1):
        for j in range(i + 1, limit):
            yield (i, j)


class StatLabel(NamedTuple):
    weight_category: str
    level: Union[int, Tuple[int]]
    channel: Union[str, Tuple[str]]
    temporal: Union[str, Tuple[str]]
    note: Any = None
    orientation: Union[None, int, Tuple[int]] = None


class SyntheticSPyramid:
    """Deterministic stand-in for a steerable pyramid of one color channel."""

    def __init__(self, key, cname, N=2, H=16, W=16, levels=2, orientations=4):
        self.cname = cname
        self.tname = None
        self.levels = levels
        k0, k1, _, _ = jax.random.split(key, 4)
        self._orig = jax.random.normal(k0, (N, 1, H, W), dtype=jnp.float32)
        self._low, self._mag, self._real = {}, {}, {}
        for i in range(1, levels + 1):
            h, w = H // (2 ** i), W // (2 ** i)
            ka, kb, kc = jax.random.split(jax.random.fold_in(k1, i), 3)
            self._low[i] = jax.random.normal(ka, (N, 1, h, w), dtype=jnp.float32)
            self._mag[i] = jnp.abs(
                jax.random.normal(kb, (N, orientations, h, w), dtype=jnp.float32))
            self._real[i] = jax.random.normal(
                kc, (N, orientations, h, w), dtype=jnp.float32)

    def original_image(self):
        return self._orig

    def low_pass_image(self, i):
        return self._low[i]

    def edge_magnitude_images(self, i):
        return self._mag[i]

    def edge_real_images(self, i):
        return self._real[i]

    def lowpass_range(self):
        return range(1, self.levels + 1)

    def edge_range(self):
        return range(1, self.levels + 1)

    def bandpass_range(self):
        return range(1, self.levels + 1)


# ----------------------------------------------------------------------------
# CrossColorStatistics (forward semantics mirrored, one fused Pallas call)
# ----------------------------------------------------------------------------
class CrossColorStatisticsPallas:
    def __init__(self):
        self.per_level_weight = math.sqrt(2)
        self.category_weights = {
            'mean': 2, 'variance': 1, 'skew': 1, 'kurtosis': 1,
            'bandpass_variance': 40, 'autocorrelation': 0.5, 'edge_mean': 10,
            'edge_variance': 80, 'edge_kurtosis': 800,
            'edge_autocorrelation': 2, 'edge_correlation': 80, 'edge_stop': 100,
            'edge_continue': 80, 'phase_correlation': 400, 'covariance': 1,
            'edge_covariance': 80, 'phase_covariance': 400,
        }
        self.stat_color_base_covariance = False
        self.stat_color_bandpass_covariance = False
        self.stat_color_low_covariance = True
        self.stat_color_edge_covariance = True
        self.stat_color_phase_covariance = True

    def _level_weight(self, level):
        if level is None:
            return 1
        if hasattr(level, '__iter__'):
            level = max(level)
        return self.per_level_weight ** level

    def forward(self, spyr_list, stat_labels=None):
        temporal = spyr_list[0].tname

        # 1) Collect all stat blocks (host-side bookkeeping only; no per-
        #    orientation slicing -- full (N, O, H, W) blocks are kept intact).
        entries = []  # (a4d, b4d, category, chnames, level, note, has_ori)
        for a, b in range_unique_pairs(len(spyr_list)):
            A, B = spyr_list[a], spyr_list[b]
            chnames = (A.cname, B.cname)
            if self.stat_color_base_covariance:
                entries.append((A.original_image(), B.original_image(),
                                'covariance', chnames, None, None, False))
            if self.stat_color_bandpass_covariance:
                # TODO(synk): bandpass images not generated by the synthetic
                # pyramid since this stat is disabled by default in the module.
                pass
            if self.stat_color_low_covariance:
                for i in A.lowpass_range():
                    entries.append((A.low_pass_image(i), B.low_pass_image(i),
                                    'covariance', chnames, i, None, False))
            if self.stat_color_edge_covariance:
                for i in A.edge_range():
                    entries.append((A.edge_magnitude_images(i),
                                    B.edge_magnitude_images(i),
                                    'edge_covariance', chnames, i, None, True))
            if self.stat_color_phase_covariance:
                for i in A.edge_range():
                    entries.append((A.edge_real_images(i),
                                    B.edge_real_images(i),
                                    'phase_covariance', chnames, i, 'er', True))
        if not entries:
            return []

        # 2) Flatten every block to (rows, HW) and record per-stat row slices
        #    plus per-row scale = weight / true_HW (weight folded at trace time).
        chunks_a, chunks_b, hw_list, scale_list = [], [], [], []
        stat_records = []   # (start, stop, step, n_batch, label)
        row_offset = 0
        for (a_img, b_img, cat, chnames, level, note, has_ori) in entries:
            weight = float(self.category_weights[cat])
            if self.per_level_weight:
                weight *= self._level_weight(level)
            N, C, h, w = a_img.shape
            hw, nrows = h * w, N * C
            chunks_a.append(a_img.reshape(nrows, hw))
            chunks_b.append(b_img.reshape(nrows, hw))
            hw_list.append(hw)
            scale_list.extend([weight / hw] * nrows)
            if has_ori:
                for ori in range(C):
                    stat_records.append(
                        (row_offset + ori, row_offset + nrows, C, N,
                         StatLabel(cat, level, chnames, temporal, note, ori)))
            else:
                stat_records.append(
                    (row_offset, row_offset + nrows, 1, N,
                     StatLabel(cat, level, chnames, temporal, note, None)))
            row_offset += nrows

        total_rows = row_offset
        max_hw = max(hw_list)
        in_dtype = jnp.result_type(*[c.dtype for c in chunks_a + chunks_b])
        itemsize = jnp.dtype(in_dtype).itemsize
        lane_tile, hw_tile, hw_pad, r_pad = _choose_tiles(
            total_rows, max_hw, itemsize)

        a_slab = _build_slab(chunks_a, hw_list, hw_pad, r_pad, in_dtype)
        b_slab = _build_slab(chunks_b, hw_list, hw_pad, r_pad, in_dtype)
        scale_row = jnp.zeros((1, r_pad), jnp.float32).at[0, :total_rows].set(
            jnp.asarray(scale_list, dtype=jnp.float32))

        # 3) One fused Pallas call for every stat.
        fused = fused_weighted_covariance_pool(
            a_slab, b_slab, scale_row, hw_tile, lane_tile)
        row = fused[0]

        # 4) Unpack the lane-dense result vector back into the per-stat list
        #    (same order/shapes as the reference module).
        stats = []
        for (start, stop, step, n, label) in stat_records:
            stats.append(row[start:stop:step].reshape(n, 1))
            if stat_labels is not None:
                stat_labels.append(label)
        return stats


# Pure-JAX reference for validation
def _ref_stat(a, b, weight):
    return (weight * jnp.mean(a.astype(jnp.float32) * b.astype(jnp.float32),
                              axis=(2, 3)))


if __name__ == "__main__":
    key = jax.random.PRNGKey(0)
    kr, kg, kb = jax.random.split(key, 3)
    # Three color-channel pyramids (e.g. gray, red-green, blue-yellow)
    spyr_list = [
        SyntheticSPyramid(kr, 'gry'),
        SyntheticSPyramid(kg, 'rg'),
        SyntheticSPyramid(kb, 'by'),
    ]

    module = CrossColorStatisticsPallas()
    labels = []
    stats = module.forward(spyr_list, stat_labels=labels)
    stats = [jax.block_until_ready(s) for s in stats]

    # Cross-check against a pure-JAX reference of the same semantics.
    idx = 0
    for a, b in range_unique_pairs(len(spyr_list)):
        A, B = spyr_list[a], spyr_list[b]
        for i in A.lowpass_range():
            w = module.category_weights['covariance'] * module._level_weight(i)
            ref = _ref_stat(A.low_pass_image(i), B.low_pass_image(i), w)
            assert jnp.allclose(stats[idx], ref, rtol=1e-5, atol=1e-4)
            idx += 1
        for i in A.edge_range():
            for ori in range(A.edge_magnitude_images(i).shape[1]):
                w = module.category_weights['edge_covariance'] * module._level_weight(i)
                ref = _ref_stat(A.edge_magnitude_images(i)[:, ori:ori + 1],
                                B.edge_magnitude_images(i)[:, ori:ori + 1], w)
                assert jnp.allclose(stats[idx], ref, rtol=1e-5, atol=1e-4)
                idx += 1
        for i in A.edge_range():
            for ori in range(A.edge_real_images(i).shape[1]):
                w = module.category_weights['phase_covariance'] * module._level_weight(i)
                ref = _ref_stat(A.edge_real_images(i)[:, ori:ori + 1],
                                B.edge_real_images(i)[:, ori:ori + 1], w)
                assert jnp.allclose(stats[idx], ref, rtol=1e-5, atol=1e-4)
                idx += 1
    assert idx == len(stats) == len(labels)

    print("KERNEL_OK")
</pallas_src>

<mosaic_0001>
module attributes {stable_mosaic.version = 11 : i64} {
  func.func @kernel(%arg0: i32, %arg1: i32, %arg2: memref<64x128xf32, #tpu.memory_space<vmem>>, %arg3: memref<64x128xf32, #tpu.memory_space<vmem>>, %arg4: memref<1x128xf32, #tpu.memory_space<vmem>>, %arg5: memref<1x128xf32, #tpu.memory_space<vmem>>, %arg6: memref<1x128xf32, #tpu.memory_space<vmem>>) attributes {dimension_semantics = [#tpu.dimension_semantics<parallel>, #tpu.dimension_semantics<arbitrary>], iteration_bounds = array<i64: 1, 1>, scalar_prefetch = 0 : i64, scratch_operands = 1 : i64, tpu.core_type = #tpu.core_type<tc>, window_params = [{transform_indices = @transform_0, window_bounds = array<i64: 64, 128>}, {transform_indices = @transform_1, window_bounds = array<i64: 64, 128>}, {transform_indices = @transform_2, window_bounds = array<i64: 1, 128>}, {transform_indices = @transform_3, window_bounds = array<i64: 1, 128>}]} {
    %c0_i32 = arith.constant 0 : i32
    %0 = arith.cmpi eq, %arg1, %c0_i32 : i32
    %1 = arith.extui %0 : i1 to i32
    %c0_i32_0 = arith.constant 0 : i32
    %2 = arith.cmpi ne, %1, %c0_i32_0 : i32
    scf.if %2 {
      %cst_10 = arith.constant 0.000000e+00 : f32
      %14 = vector.broadcast %cst_10 : f32 to vector<1x128xf32>
      %c0_11 = arith.constant 0 : index
      %c0_12 = arith.constant 0 : index
      %15 = vector.load %arg6[%c0_11, %c0_12] : memref<1x128xf32, #tpu.memory_space<vmem>>, vector<1x128xf32>
      tpu.vector_store %arg6[%c0_11, %c0_12], %14 {strides = array<i32>} : memref<1x128xf32, #tpu.memory_space<vmem>>, vector<1x128xf32>,
    } else {
    }
    %c0 = arith.constant 0 : index
    %c0_1 = arith.constant 0 : index
    %3 = vector.load %arg2[%c0, %c0_1] : memref<64x128xf32, #tpu.memory_space<vmem>>, vector<64x128xf32>
    %c0_2 = arith.constant 0 : index
    %c0_3 = arith.constant 0 : index
    %4 = vector.load %arg3[%c0_2, %c0_3] : memref<64x128xf32, #tpu.memory_space<vmem>>, vector<64x128xf32>
    %5 = arith.mulf %3, %4 : vector<64x128xf32>
    %c0_4 = arith.constant 0 : index
    %c0_5 = arith.constant 0 : index
    %6 = vector.load %arg6[%c0_4, %c0_5] : memref<1x128xf32, #tpu.memory_space<vmem>>, vector<1x128xf32>
    %cst = arith.constant dense<0.000000e+00> : vector<128xf32>
    %7 = vector.multi_reduction <add>, %5, %cst [0] : vector<64x128xf32> to vector<128xf32>
    %8 = vector.shape_cast %7 : vector<128xf32> to vector<1x128xf32>
    %9 = arith.addf %6, %8 : vector<1x128xf32>
    %c0_6 = arith.constant 0 : index
    %c0_7 = arith.constant 0 : index
    %10 = vector.load %arg6[%c0_6, %c0_7] : memref<1x128xf32, #tpu.memory_space<vmem>>, vector<1x128xf32>
    tpu.vector_store %arg6[%c0_6, %c0_7], %9 {strides = array<i32>} : memref<1x128xf32, #tpu.memory_space<vmem>>, vector<1x128xf32>,
    %c0_i32_8 = arith.constant 0 : i32
    %11 = arith.cmpi eq, %arg1, %c0_i32_8 : i32
    %12 = arith.extui %11 : i1 to i32
    %c0_i32_9 = arith.constant 0 : i32
    %13 = arith.cmpi ne, %12, %c0_i32_9 : i32
    scf.if %13 {
      %c0_10 = arith.constant 0 : index
      %c0_11 = arith.constant 0 : index
      %14 = vector.load %arg6[%c0_10, %c0_11] : memref<1x128xf32, #tpu.memory_space<vmem>>, vector<1x128xf32>
      %c0_12 = arith.constant 0 : index
      %c0_13 = arith.constant 0 : index
      %15 = vector.load %arg4[%c0_12, %c0_13] : memref<1x128xf32, #tpu.memory_space<vmem>>, vector<1x128xf32>
      %16 = arith.mulf %14, %15 : vector<1x128xf32>
      %c0_14 = arith.constant 0 : index
      %c0_15 = arith.constant 0 : index
      %17 = vector.load %arg5[%c0_14, %c0_15] : memref<1x128xf32, #tpu.memory_space<vmem>>, vector<1x128xf32>
      tpu.vector_store %arg5[%c0_14, %c0_15], %16 {strides = array<i32>} : memref<1x128xf32, #tpu.memory_space<vmem>>, vector<1x128xf32>,
    } else {
    }
    return
  }
  func.func @transform_0(%arg0: i32, %arg1: i32) -> (i32, i32) {
    %c0_i32 = arith.constant 0 : i32
    return %arg1, %arg0 : i32, i32
  }
  func.func @transform_1(%arg0: i32, %arg1: i32) -> (i32, i32) {
    %c0_i32 = arith.constant 0 : i32
    return %arg1, %arg0 : i32, i32
  }
  func.func @transform_2(%arg0: i32, %arg1: i32) -> (i32, i32) {
    %c0_i32 = arith.constant 0 : i32
    %c0_i32_0 = arith.constant 0 : i32
    return %c0_i32, %arg0 : i32, i32
  }
  func.func @transform_3(%arg0: i32, %arg1: i32) -> (i32, i32) {
    %c0_i32 = arith.constant 0 : i32
    %c0_i32_0 = arith.constant 0 : i32
    return %c0_i32, %arg0 : i32, i32
  }
}

</mosaic_0001>

<llo_original>
// kernel: tpu_custom_call.1
$region0: #{tpu_custom_call.1}
  #allocation0 [shape = 'u32[]', space=smem, size = 0x4, offset = 0x4, fixed_abs, tag = 'smem constant byte address 0x4 - core index']
  #allocation1 [shape = 'u32[144,128]{1,0:T(1,128)}', space=vmem, size = 0x12000, scoped, tag = 'internal scratch']
  #allocation2 [shape = 'f32[1,128]{1,0:T(1,128)}', space=vmem, size = 0x200, scoped, tag = 'scratch operand']
  %s0 = inlined_call_operand.hbm [shape: f32[64,128], index: 0, kind: input, shape index: {}]
  %s1 = inlined_call_operand.hbm [shape: f32[64,128], index: 1, kind: input, shape index: {}]
  %s2 = inlined_call_operand.vmem [shape: f32[1,128], index: 2, kind: input, shape index: {}]
  %s3 = inlined_call_operand.hbm [shape: f32[1,128], index: 3, kind: output, shape index: {}]
  %s4 = sld [smem:[#allocation0]]
  $region38: #{tpu_custom_call.1} parent=0
    _
  %s6 = ssub.s32 1, %s4
  %s7 = scalar_select 0, %s6, %s4
  $region1: #{tpu_custom_call.1} parent=0
    #allocation3 [shape = 'u8[32768]{0}', space=vmem, size = 0x8000, scoped, tag = 'input window, operand 0, single buffered']
    #allocation4 [shape = 's32[1]{0}', space=sflag, size = 0x4, scoped, tag = 'scoped memory for tpu_custom_call.1']
    #allocation5 [shape = 's32[1]{0}', space=sflag, size = 0x4, scoped, tag = 'scoped memory for tpu_custom_call.1']
    #allocation6 [shape = 'u8[32768]{0}', space=vmem, size = 0x8000, scoped, tag = 'input window, operand 1, single buffered']
    #allocation7 [shape = 's32[1]{0}', space=sflag, size = 0x4, scoped, tag = 'scoped memory for tpu_custom_call.1']
    #allocation8 [shape = 'u8[512]{0}', space=vmem, size = 0x400, scoped, tag = 'output window, operand 0, single buffered']
    %8 = vsyncpa [#allocation4], 0
    %9 = vsyncpa [#allocation7], 0
    %10 = vsyncpa [#allocation5], 0
    // Predicated region
    $region2: #{tpu_custom_call.1} parent=1 // pred_check
      _
    $region3: #{tpu_custom_call.1} parent=1 // pred_check_branch
      %12 = sbr.rel (0) target = $region5
    $region4: #{tpu_custom_call.1} parent=1 // pred_region
      %s14 = ssub.s32 1024, 1024
      %15 = vsyncadd [#allocation4], %s14
      %s16 = sshll.u32 [#allocation3], 4
      %s17 = int_to_ptr.vmem [resolvable:$true] %s16
      %22 = dma.hbm_to_vmem [thread:$0]  %s0, 1024, %s17, [#allocation4], 128, 128, 8
    $region5: #{tpu_custom_call.1} parent=1 // pred_fallthru
      _
    // Predicated region
    $region6: #{tpu_custom_call.1} parent=1 // pred_check
      _
    $region7: #{tpu_custom_call.1} parent=1 // pred_check_branch
      %24 = sbr.rel (0) target = $region9
    $region8: #{tpu_custom_call.1} parent=1 // pred_region
      %s26 = ssub.s32 1024, 1024
      %27 = vsyncadd [#allocation7], %s26
      %s28 = sshll.u32 [#allocation6], 4
      %s29 = int_to_ptr.vmem [resolvable:$true] %s28
      %34 = dma.hbm_to_vmem [thread:$0]  %s1, 1024, %s29, [#allocation7], 128, 128, 8
    $region9: #{tpu_custom_call.1} parent=1 // pred_fallthru
      _
    // Predicated region
    $region10: #{tpu_custom_call.1} parent=1 // pred_check
      _
    $region11: #{tpu_custom_call.1} parent=1 // pred_check_branch
      %36 = sbr.rel (0) target = $region13
    $region12: #{tpu_custom_call.1} parent=1 // pred_region
      _
    $region13: #{tpu_custom_call.1} parent=1 // pred_fallthru
      _
    // Predicated region
    $region14: #{tpu_custom_call.1} parent=1 // pred_check
      _
    $region15: #{tpu_custom_call.1} parent=1 // pred_check_branch
      %38 = sbr.rel (0) target = $region17
    $region16: #{tpu_custom_call.1} parent=1 // pred_region
      %39 = dma.done [#allocation4], 1024
    $region17: #{tpu_custom_call.1} parent=1 // pred_fallthru
      _
    // Predicated region
    $region18: #{tpu_custom_call.1} parent=1 // pred_check
      _
    $region19: #{tpu_custom_call.1} parent=1 // pred_check_branch
      %41 = sbr.rel (0) target = $region21
    $region20: #{tpu_custom_call.1} parent=1 // pred_region
      %42 = dma.done [#allocation7], 1024
    $region21: #{tpu_custom_call.1} parent=1 // pred_fallthru
      _
    %p43 = scmp.eq.s32.totalorder 0, 0
    // Predicated region
    $region22: #{tpu_custom_call.1} parent=1 // pred_check
      %p44 = pneg %p43
    $region23: #{tpu_custom_call.1} parent=1 // pred_check_branch
      %46 = sbr.rel (%p44) target = $region25
    $region24: #{tpu_custom_call.1} parent=1 // pred_region
      %47 = vst [vmem:[#allocation2] sm:$0x1] 0.0
    $region25: #{tpu_custom_call.1} parent=1 // pred_fallthru
      _
    %v48 = vld [vmem:[#allocation3] sm:$0xff]
    %v49 = vld [vmem:[#allocation3 + $0x8] sm:$0xff]
    %v50 = vld [vmem:[#allocation3 + $0x10] sm:$0xff]
    %v51 = vld [vmem:[#allocation3 + $0x18] sm:$0xff]
    %v52 = vld [vmem:[#allocation3 + $0x20] sm:$0xff]
    %v53 = vld [vmem:[#allocation3 + $0x28] sm:$0xff]
    %v54 = vld [vmem:[#allocation3 + $0x30] sm:$0xff]
    %v55 = vld [vmem:[#allocation3 + $0x38] sm:$0xff]
    %v56 = vld [vmem:[#allocation6] sm:$0xff]
    %v57 = vld [vmem:[#allocation6 + $0x8] sm:$0xff]
    %v58 = vld [vmem:[#allocation6 + $0x10] sm:$0xff]
    %v59 = vld [vmem:[#allocation6 + $0x18] sm:$0xff]
    %v60 = vld [vmem:[#allocation6 + $0x20] sm:$0xff]
    %v61 = vld [vmem:[#allocation6 + $0x28] sm:$0xff]
    %v62 = vld [vmem:[#allocation6 + $0x30] sm:$0xff]
    %v63 = vld [vmem:[#allocation6 + $0x38] sm:$0xff]
    %v64 = vmul.f32 %v48, %v56
    %v65 = vmul.f32 %v49, %v57
    %v66 = vmul.f32 %v50, %v58
    %v67 = vmul.f32 %v51, %v59
    %v68 = vmul.f32 %v52, %v60
    %v69 = vmul.f32 %v53, %v61
    %v70 = vmul.f32 %v54, %v62
    %v71 = vmul.f32 %v55, %v63
    %v72 = vld [vmem:[#allocation2] sm:$0x1]
    %v73 = vadd.f32 %v64, %v65
    %v74 = vadd.f32 %v73, %v66
    %v75 = vadd.f32 %v74, %v67
    %v76 = vadd.f32 %v75, %v68
    %v77 = vadd.f32 %v76, %v69
    %v78 = vadd.f32 %v77, %v70
    %v79 = vadd.f32 %v78, %v71
    %v80 = vrot.slane %v79, 4
    %v81 = vadd.f32 %v79, %v80
    %v82 = vrot.slane %v81, 2
    %v83 = vadd.f32 %v81, %v82
    %v84 = vrot.slane %v83, 1
    %v85 = vadd.f32 %v83, %v84
    %v86 = vadd.f32 %v72, %v85
    %87 = vst [vmem:[#allocation2] sm:$0x1] %v86
    // Predicated region
    $region26: #{tpu_custom_call.1} parent=1 // pred_check
      %p88 = pneg %p43
    $region27: #{tpu_custom_call.1} parent=1 // pred_check_branch
      %90 = sbr.rel (%p88) target = $region29
    $region28: #{tpu_custom_call.1} parent=1 // pred_region
      %v91 = vld [vmem:[#allocation2] sm:$0x1]
      %v92 = vld [vmem:[%s2] sm:$0x1]
      %v93 = vmul.f32 %v91, %v92
      %94 = vst [vmem:[#allocation8] sm:$0x1] %v93
    $region29: #{tpu_custom_call.1} parent=1 // pred_fallthru
      _
    // Predicated region
    $region30: #{tpu_custom_call.1} parent=1 // pred_check
      _
    $region31: #{tpu_custom_call.1} parent=1 // pred_check_branch
      %96 = sbr.rel (0) target = $region33
    $region32: #{tpu_custom_call.1} parent=1 // pred_region
      %s98 = ssub.s32 16, 16
      %99 = vsyncadd [#allocation5], %s98
      %s101 = sshll.u32 [#allocation8], 4
      %s102 = int_to_ptr.vmem [resolvable:$true] %s101
      %104 = dma.vmem_to_hbm [thread:$0]  %s102, 16, %s3, [#allocation5]
    $region33: #{tpu_custom_call.1} parent=1 // pred_fallthru
      _
    // Predicated region
    $region34: #{tpu_custom_call.1} parent=1 // pred_check
      _
    $region35: #{tpu_custom_call.1} parent=1 // pred_check_branch
      %106 = sbr.rel (0) target = $region37
    $region36: #{tpu_custom_call.1} parent=1 // pred_region
      %107 = dma.done [#allocation5], 16
    $region37: #{tpu_custom_call.1} parent=1 // pred_fallthru
      _
    %108 = vsyncpa [#allocation4], 1
    %109 = vsyncpa [#allocation7], 1
    %110 = vsyncpa [#allocation5], 1

</llo_original>
